<compile_context>
chip_gen: v7x
topology: tpu7x:2x2x1
jax: 0.10.0
libtpu: 0.0.40
codegen_flags: <defaults>
</compile_context>

<pallas_src>
import math
import inspect
import functools

import jax
import jax.numpy as jnp
from jax.experimental import pallas as pl
from jax.experimental.pallas import tpu as pltpu


def _round_up(x, m):
    return ((x + m - 1) // m) * m


# pipeline_mode / Buffered availability guard (minor-version safety).
_HAS_PIPELINE_MODE = (
    hasattr(pl, "Buffered")
    and "pipeline_mode" in inspect.signature(pl.BlockSpec).parameters
)


# ----------------------------------------------------------------------------
# Kernels
# ----------------------------------------------------------------------------
def _kernel_multi_k(x_ref, wt_ref, b_ref, o_ref, acc_ref, *, inv_temperature):
    # x_ref:  (tm, tk)  bf16 features tile          [M, K]
    # wt_ref: (tk, tn)  bf16 pre-transposed weights [K, N]
    # b_ref:  (1,  tn)  f32 bias tile
    # o_ref:  (tm, tn)  output tile
    # acc_ref:(tm, tn)  f32 accumulator, resident across the K grid axis
    k = pl.program_id(2)

    @pl.when(k == 0)
    def _():
        acc_ref[...] = jnp.zeros_like(acc_ref)

    acc_ref[...] += jnp.dot(x_ref[...], wt_ref[...],
                            preferred_element_type=jnp.float32)

    @pl.when(k == pl.num_programs(2) - 1)
    def _():
        out = (acc_ref[...] + b_ref[...].astype(jnp.float32)) * inv_temperature
        o_ref[...] = out.astype(o_ref.dtype)


def _kernel_single_k(x_ref, wt_ref, b_ref, o_ref, *, inv_temperature):
    # Single K step: no accumulator scratch needed, fuse epilogue directly.
    acc = jnp.dot(x_ref[...], wt_ref[...], preferred_element_type=jnp.float32)
    out = (acc + b_ref[...].astype(jnp.float32)) * inv_temperature
    o_ref[...] = out.astype(o_ref.dtype)


# ----------------------------------------------------------------------------
# Parameter construction (one-time transpose / pad / cast)
# ----------------------------------------------------------------------------
def init_params(key, num_features, num_classes, dtype=jnp.float32):
    """Matches the PyTorch module init: weights ~ U(-sqrt(1/F), sqrt(1/F)),
    bias = zeros. Returns raw (C, F) weights and (C,) bias."""
    bound = math.sqrt(1.0 / num_features)
    weights = jax.random.uniform(
        key, (num_classes, num_features), dtype=dtype, minval=-bound, maxval=bound
    )
    bias = jnp.zeros((num_classes,), dtype=dtype)
    return weights, bias


def prepare_params(weights, bias, *, compute_dtype=jnp.bfloat16, tn=None, tk=None):
    """One-time prep: transpose weights to [F, C] = [K, N], zero-pad to the
    chosen N/K tile multiples, cast to the MXU feed dtype (bf16 by default),
    and pad the bias. Done once at parameter-construction time, NOT per call."""
    C, F = weights.shape
    assert bias.shape == (C,), "bias shape mismatch"

    cp128 = _round_up(C, 128)
    fp128 = _round_up(F, 128)
    if tn is None:
        tn = min(cp128, 512)
        # Prefer >= 2 N grid blocks when C allows so both v7x TensorCores
        # receive parallel N work.
        if tn == cp128 and cp128 >= 256:
            tn = _round_up(cp128 // 2, 128)
    if tk is None:
        tk = min(fp128, 1024)

    Cp = _round_up(C, tn)
    Fp = _round_up(F, tk)

    wt = jnp.asarray(weights).T.astype(compute_dtype)   # (F, C) one-time transpose
    if (Fp, Cp) != (F, C):
        wt = jnp.pad(wt, ((0, Fp - F), (0, Cp - C)))

    b2d = jnp.asarray(bias, jnp.float32).reshape(1, C)
    if Cp != C:
        b2d = jnp.pad(b2d, ((0, 0), (0, Cp - C)))

    return {
        "weights_t": wt,          # (Fp, Cp) compute_dtype
        "bias2d": b2d,            # (1, Cp)  f32
        "num_features": F,
        "num_classes": C,
        "Fp": Fp, "Cp": Cp, "tn": tn, "tk": tk,
        "compute_dtype": compute_dtype,
    }


# ----------------------------------------------------------------------------
# Forward
# ----------------------------------------------------------------------------
def softmax_loss_first_part(features, params, temperature=1.0, *, tm=None,
                            out_dtype=None):
    """features: (B, F) -> logits (B, C) = (features @ W.T + bias) / temperature."""
    if not isinstance(temperature, (int, float)):
        raise TypeError("temperature must be a Python scalar (static)")
    if float(temperature) == 0.0:
        raise ValueError("temperature must be non-zero")

    B, F = features.shape
    assert F == params["num_features"], "feature dim mismatch"
    C = params["num_classes"]
    Fp, Cp = params["Fp"], params["Cp"]
    tn, tk = params["tn"], params["tk"]
    cdtype = params["compute_dtype"]
    wt, b2d = params["weights_t"], params["bias2d"]

    if out_dtype is None:
        out_dtype = features.dtype

    # M tile: multiple of 16 (bf16 sublane packing), capped at 512.
    if tm is None:
        tm = min(_round_up(B, 16), 512)
    Bp = _round_up(B, tm)

    # Per-call feature prep only: cast to the MXU feed dtype and zero-pad.
    # Padded K contributes zeros; padded M rows are sliced off afterwards.
    x = features.astype(cdtype)
    if (Bp, Fp) != (B, F):
        x = jnp.pad(x, ((0, Bp - B), (0, Fp - F)))

    grid_m, grid_n, grid_k = Bp // tm, Cp // tn, Fp // tk
    inv_t = 1.0 / float(temperature)

    # Small-batch regime (single M block): the kernel is HBM-bound on weight
    # streaming -> 3-deep buffering of the weights input hides the DMA.
    deep_weights = (_HAS_PIPELINE_MODE and grid_m == 1
                    and grid_n * grid_k >= 3)
    w_kwargs = {"pipeline_mode": pl.Buffered(3)} if deep_weights else {}

    comp_isz = jnp.dtype(cdtype).itemsize
    out_isz = jnp.dtype(out_dtype).itemsize
    cost = pl.CostEstimate(
        flops=2 * Bp * Cp * Fp,
        transcendentals=0,
        bytes_accessed=(Bp * Fp * comp_isz + Fp * Cp * comp_isz
                        + Cp * 4 + Bp * Cp * out_isz),
    )

    if grid_k == 1:
        # Single-K fast path: no accumulator scratch, fused epilogue.
        grid_spec = pltpu.PrefetchScalarGridSpec(
            num_scalar_prefetch=0,
            grid=(grid_m, grid_n),
            in_specs=[
                pl.BlockSpec((tm, tk), lambda i, j: (i, 0)),             # features
                pl.BlockSpec((tk, tn), lambda i, j: (0, j), **w_kwargs), # weights.T
                pl.BlockSpec((1, tn), lambda i, j: (0, j)),              # bias
            ],
            out_specs=pl.BlockSpec((tm, tn), lambda i, j: (i, j)),
        )
        kernel = functools.partial(_kernel_single_k, inv_temperature=inv_t)
        dim_sem = ("parallel", "parallel")
    else:
        grid_spec = pltpu.PrefetchScalarGridSpec(
            num_scalar_prefetch=0,
            grid=(grid_m, grid_n, grid_k),
            in_specs=[
                pl.BlockSpec((tm, tk), lambda i, j, k: (i, k)),             # features
                pl.BlockSpec((tk, tn), lambda i, j, k: (k, j), **w_kwargs), # weights.T
                pl.BlockSpec((1, tn), lambda i, j, k: (0, j)),              # bias
            ],
            out_specs=pl.BlockSpec((tm, tn), lambda i, j, k: (i, j)),
            scratch_shapes=[pltpu.VMEM((tm, tn), jnp.float32)],
        )
        kernel = functools.partial(_kernel_multi_k, inv_temperature=inv_t)
        dim_sem = ("parallel", "parallel", "arbitrary")

    out_padded = pl.pallas_call(
        kernel,
        out_shape=jax.ShapeDtypeStruct((Bp, Cp), out_dtype),
        grid_spec=grid_spec,
        compiler_params=pltpu.CompilerParams(
            dimension_semantics=dim_sem,
            # Safe on v5e/v6e (128 MiB physical) and v7x (64 MiB physical);
            # well above the bf16 tile footprint, well above v5e's 16 MiB default.
            vmem_limit_bytes=48 << 20,
        ),
        cost_estimate=cost,
    )(x, wt, b2d)

    if (Bp, Cp) != (B, C):
        out_padded = out_padded[:B, :C]
    return out_padded


# ----------------------------------------------------------------------------
# Demo / correctness checks
# ----------------------------------------------------------------------------
if __name__ == "__main__":
    temperature = 2.0
    key = jax.random.PRNGKey(0)
    k_feat, k_w, k_feat2, k_w2 = jax.random.split(key, 4)

    # --- Test 1: module-sized shapes; exercises the single-K fast path.
    num_features, num_classes, batch = 32, 16, 8
    features = jax.random.normal(k_feat, (batch, num_features), dtype=jnp.float32)
    weights, bias = init_params(k_w, num_features, num_classes)
    params = prepare_params(weights, bias)           # one-time T / pad / bf16 cast

    logits = softmax_loss_first_part(features, params, temperature)
    logits = jax.block_until_ready(logits)

    ref = (features @ weights.T + bias) / temperature
    assert logits.shape == (batch, num_classes)
    # bf16 MXU operands with f32 accumulation: loosened tolerance vs pure-f32 ref.
    assert jnp.allclose(logits, ref, atol=5e-2, rtol=5e-2)

    # --- Test 2: exercises the multi-K accumulator path (3 K-steps, 2 N-blocks)
    #     and the deep-buffered weight stream (single M block).
    nf2, nc2, b2 = 384, 256, 32
    features2 = jax.random.normal(k_feat2, (b2, nf2), dtype=jnp.float32)
    weights2, bias2 = init_params(k_w2, nf2, nc2)
    params2 = prepare_params(weights2, bias2, tk=128, tn=128)

    logits2 = softmax_loss_first_part(features2, params2, temperature)
    logits2 = jax.block_until_ready(logits2)

    ref2 = (features2 @ weights2.T + bias2) / temperature
    assert logits2.shape == (b2, nc2)
    assert jnp.allclose(logits2, ref2, atol=5e-2, rtol=5e-2)

    print("KERNEL_OK")
</pallas_src>

<mosaic_0001>
module attributes {stable_mosaic.version = 11 : i64} {
  func.func @_kernel_single_k(%arg0: i32, %arg1: i32, %arg2: memref<16x128xbf16, #tpu.memory_space<vmem>>, %arg3: memref<128x128xbf16, #tpu.memory_space<vmem>>, %arg4: memref<1x128xf32, #tpu.memory_space<vmem>>, %arg5: memref<16x128xf32, #tpu.memory_space<vmem>>) attributes {dimension_semantics = [#tpu.dimension_semantics<parallel>, #tpu.dimension_semantics<parallel>], iteration_bounds = array<i64: 1, 1>, scalar_prefetch = 0 : i64, scratch_operands = 0 : i64, tpu.core_type = #tpu.core_type<tc>, window_params = [{transform_indices = @transform_0, window_bounds = array<i64: 16, 128>}, {transform_indices = @transform_1, window_bounds = array<i64: 128, 128>}, {transform_indices = @transform_2, window_bounds = array<i64: 1, 128>}, {transform_indices = @transform_3, window_bounds = array<i64: 16, 128>}]} {
    %c0 = arith.constant 0 : index
    %c0_0 = arith.constant 0 : index
    %0 = vector.load %arg2[%c0, %c0_0] : memref<16x128xbf16, #tpu.memory_space<vmem>>, vector<16x128xbf16>
    %c0_1 = arith.constant 0 : index
    %c0_2 = arith.constant 0 : index
    %1 = vector.load %arg3[%c0_1, %c0_2] : memref<128x128xbf16, #tpu.memory_space<vmem>>, vector<128x128xbf16>
    %cst = arith.constant dense<0.000000e+00> : vector<16x128xf32>
    %2 = tpu.matmul %0, %1, %cst {dimension_numbers = #tpu.dot_dimension_numbers<[1], [0], [0], [1], [0, 0, 1, 1], [], []>} : vector<16x128xbf16>, vector<128x128xbf16>, vector<16x128xf32> -> vector<16x128xf32>
    %c0_3 = arith.constant 0 : index
    %c0_4 = arith.constant 0 : index
    %3 = vector.load %arg4[%c0_3, %c0_4] : memref<1x128xf32, #tpu.memory_space<vmem>>, vector<1x128xf32>
    %4 = vector.broadcast %3 : vector<1x128xf32> to vector<16x128xf32>
    %5 = arith.addf %2, %4 : vector<16x128xf32>
    %cst_5 = arith.constant 5.000000e-01 : f32
    %6 = vector.broadcast %cst_5 : f32 to vector<16x128xf32>
    %7 = arith.mulf %5, %6 : vector<16x128xf32>
    %c0_6 = arith.constant 0 : index
    %c0_7 = arith.constant 0 : index
    %8 = vector.load %arg5[%c0_6, %c0_7] : memref<16x128xf32, #tpu.memory_space<vmem>>, vector<16x128xf32>
    tpu.vector_store %arg5[%c0_6, %c0_7], %7 {strides = array<i32>} : memref<16x128xf32, #tpu.memory_space<vmem>>, vector<16x128xf32>,
    return
  }
  func.func @transform_0(%arg0: i32, %arg1: i32) -> (i32, i32) {
    %c0_i32 = arith.constant 0 : i32
    %c0_i32_0 = arith.constant 0 : i32
    return %arg0, %c0_i32 : i32, i32
  }
  func.func @transform_1(%arg0: i32, %arg1: i32) -> (i32, i32) {
    %c0_i32 = arith.constant 0 : i32
    %c0_i32_0 = arith.constant 0 : i32
    return %c0_i32, %arg1 : i32, i32
  }
  func.func @transform_2(%arg0: i32, %arg1: i32) -> (i32, i32) {
    %c0_i32 = arith.constant 0 : i32
    %c0_i32_0 = arith.constant 0 : i32
    return %c0_i32, %arg1 : i32, i32
  }
  func.func @transform_3(%arg0: i32, %arg1: i32) -> (i32, i32) {
    %c0_i32 = arith.constant 0 : i32
    return %arg0, %arg1 : i32, i32
  }
}

</mosaic_0001>

<llo_original>
// kernel: tpu_custom_call.1
$region0: #{tpu_custom_call.1}
  #allocation0 [shape = 'u32[]', space=smem, size = 0x4, offset = 0x4, fixed_abs, tag = 'smem constant byte address 0x4 - core index']
  #allocation1 [shape = 'u32[144,128]{1,0:T(1,128)}', space=vmem, size = 0x12000, scoped, tag = 'internal scratch']
  %s0 = inlined_call_operand.hbm [shape: bf16[16,128], index: 0, kind: input, shape index: {}]
  %s1 = inlined_call_operand.hbm [shape: bf16[128,128], index: 1, kind: input, shape index: {}]
  %s2 = inlined_call_operand.vmem [shape: f32[1,128], index: 2, kind: input, shape index: {}]
  %s3 = inlined_call_operand.hbm [shape: f32[16,128], index: 3, kind: output, shape index: {}]
  %s4 = sld [smem:[#allocation0]]
  $region30: #{tpu_custom_call.1} parent=0
    _
  %s6 = ssub.s32 1, %s4
  %s7 = scalar_select 0, %s6, %s4
  $region1: #{tpu_custom_call.1} parent=0
    #allocation2 [shape = 'u8[4096]{0}', space=vmem, size = 0x1000, scoped, tag = 'input window, operand 0, single buffered']
    #allocation3 [shape = 's32[1]{0}', space=sflag, size = 0x4, scoped, tag = 'scoped memory for tpu_custom_call.1']
    #allocation4 [shape = 's32[1]{0}', space=sflag, size = 0x4, scoped, tag = 'scoped memory for tpu_custom_call.1']
    #allocation5 [shape = 'u8[32768]{0}', space=vmem, size = 0x8000, scoped, tag = 'input window, operand 1, single buffered']
    #allocation6 [shape = 's32[1]{0}', space=sflag, size = 0x4, scoped, tag = 'scoped memory for tpu_custom_call.1']
    #allocation7 [shape = 'u8[8192]{0}', space=vmem, size = 0x2000, scoped, tag = 'output window, operand 0, single buffered']
    %8 = vsyncpa [#allocation3], 0
    %9 = vsyncpa [#allocation6], 0
    %10 = vsyncpa [#allocation4], 0
    // Predicated region
    $region2: #{tpu_custom_call.1} parent=1 // pred_check
      _
    $region3: #{tpu_custom_call.1} parent=1 // pred_check_branch
      %12 = sbr.rel (0) target = $region5
    $region4: #{tpu_custom_call.1} parent=1 // pred_region
      %s14 = ssub.s32 128, 128
      %15 = vsyncadd [#allocation3], %s14
      %s16 = sshll.u32 [#allocation2], 4
      %s17 = int_to_ptr.vmem [resolvable:$true] %s16
      %22 = dma.hbm_to_vmem [thread:$0]  %s0, 128, %s17, [#allocation3], 64, 64, 4
    $region5: #{tpu_custom_call.1} parent=1 // pred_fallthru
      _
    // Predicated region
    $region6: #{tpu_custom_call.1} parent=1 // pred_check
      _
    $region7: #{tpu_custom_call.1} parent=1 // pred_check_branch
      %24 = sbr.rel (0) target = $region9
    $region8: #{tpu_custom_call.1} parent=1 // pred_region
      %s26 = ssub.s32 1024, 1024
      %27 = vsyncadd [#allocation6], %s26
      %s28 = sshll.u32 [#allocation5], 4
      %s29 = int_to_ptr.vmem [resolvable:$true] %s28
      %34 = dma.hbm_to_vmem [thread:$0]  %s1, 1024, %s29, [#allocation6], 64, 64, 4
    $region9: #{tpu_custom_call.1} parent=1 // pred_fallthru
      _
    // Predicated region
    $region10: #{tpu_custom_call.1} parent=1 // pred_check
      _
    $region11: #{tpu_custom_call.1} parent=1 // pred_check_branch
      %36 = sbr.rel (0) target = $region13
    $region12: #{tpu_custom_call.1} parent=1 // pred_region
      _
    $region13: #{tpu_custom_call.1} parent=1 // pred_fallthru
      _
    // Predicated region
    $region14: #{tpu_custom_call.1} parent=1 // pred_check
      _
    $region15: #{tpu_custom_call.1} parent=1 // pred_check_branch
      %38 = sbr.rel (0) target = $region17
    $region16: #{tpu_custom_call.1} parent=1 // pred_region
      %39 = dma.done [#allocation3], 128
    $region17: #{tpu_custom_call.1} parent=1 // pred_fallthru
      _
    // Predicated region
    $region18: #{tpu_custom_call.1} parent=1 // pred_check
      _
    $region19: #{tpu_custom_call.1} parent=1 // pred_check_branch
      %41 = sbr.rel (0) target = $region21
    $region20: #{tpu_custom_call.1} parent=1 // pred_region
      %42 = dma.done [#allocation6], 1024
    $region21: #{tpu_custom_call.1} parent=1 // pred_fallthru
      _
    %v44 = vld [vmem:[#allocation2] sm:$0xf]
    %v45 = vld [vmem:[#allocation2 + $0x4] sm:$0xf]
    %v46 = vld [vmem:[#allocation5] sm:$0xf]
    %v47 = vld [vmem:[#allocation5 + $0x4] sm:$0xf]
    %v48 = vld [vmem:[#allocation5 + $0x8] sm:$0xf]
    %v49 = vld [vmem:[#allocation5 + $0xc] sm:$0xf]
    %v50 = vld [vmem:[#allocation5 + $0x10] sm:$0xf]
    %v51 = vld [vmem:[#allocation5 + $0x14] sm:$0xf]
    %v52 = vld [vmem:[#allocation5 + $0x18] sm:$0xf]
    %v53 = vld [vmem:[#allocation5 + $0x1c] sm:$0xf]
    %v54 = vld [vmem:[#allocation5 + $0x20] sm:$0xf]
    %v55 = vld [vmem:[#allocation5 + $0x24] sm:$0xf]
    %v56 = vld [vmem:[#allocation5 + $0x28] sm:$0xf]
    %v57 = vld [vmem:[#allocation5 + $0x2c] sm:$0xf]
    %v58 = vld [vmem:[#allocation5 + $0x30] sm:$0xf]
    %v59 = vld [vmem:[#allocation5 + $0x34] sm:$0xf]
    %v60 = vld [vmem:[#allocation5 + $0x38] sm:$0xf]
    %v61 = vld [vmem:[#allocation5 + $0x3c] sm:$0xf]
    %v62 = vld [vmem:[%s2] sm:$0x1]
    %v64 = vlaneseq
    %v65 = vshrl.u32 %v64, 7
    %v66 = vsub.s32 0, %v65
    %v67 = vrot.slane %v62, %v66
    %v71 = vunpack.c.l.b16 %v44
    %v72 = vunpack.c.l.b16 %v45
    %v73 = vpack.c.b16 %v72, %v71
    %v91 = vunpack.c.l.b16 %v46
    %v92 = vunpack.c.l.b16 %v47
    %v93 = vunpack.c.l.b16 %v48
    %v94 = vunpack.c.l.b16 %v49
    %v95 = vunpack.c.l.b16 %v50
    %v96 = vunpack.c.l.b16 %v51
    %v97 = vunpack.c.l.b16 %v52
    %v98 = vunpack.c.l.b16 %v53
    %v99 = vunpack.c.l.b16 %v54
    %v100 = vunpack.c.l.b16 %v55
    %v101 = vunpack.c.l.b16 %v56
    %v102 = vunpack.c.l.b16 %v57
    %v103 = vunpack.c.l.b16 %v58
    %v104 = vunpack.c.l.b16 %v59
    %v105 = vunpack.c.l.b16 %v60
    %v106 = vunpack.c.l.b16 %v61
    %v107 = vpack.c.b16 %v92, %v91
    %v108 = vpack.c.b16 %v94, %v93
    %v109 = vpack.c.b16 %v96, %v95
    %v110 = vpack.c.b16 %v98, %v97
    %v111 = vpack.c.b16 %v100, %v99
    %v112 = vpack.c.b16 %v102, %v101
    %v113 = vpack.c.b16 %v104, %v103
    %v114 = vpack.c.b16 %v106, %v105
    %123 = vmatprep.subr.bf16.mxu0 0
    %124 = vmatpush1.bf16.msra.mxu0 %v107
    %125 = vmatprep.subr.bf16.mxu0 0
    %126 = vmatpush1.bf16.msra.mxu0 %v108
    %127 = vmatprep.subr.bf16.mxu0 0
    %128 = vmatpush1.bf16.msra.mxu0 %v109
    %129 = vmatprep.subr.bf16.mxu0 0
    %130 = vmatpush1.bf16.msra.mxu0 %v110
    %131 = vmatprep.subr.bf16.mxu0 0
    %132 = vmatpush1.bf16.msra.mxu0 %v111
    %133 = vmatprep.subr.bf16.mxu0 0
    %134 = vmatpush1.bf16.msra.mxu0 %v112
    %135 = vmatprep.subr.bf16.mxu0 0
    %136 = vmatpush1.bf16.msra.mxu0 %v113
    %137 = vmatprep.subr.bf16.mxu0 0
    %138 = vmatpush1.bf16.msra.mxu0 %v114
    %139 = vmatprep.subr.bf16.mxu0 0
    %140 = vmatpush1.bf16.msra.mxu0 0
    %141 = vmatprep.subr.bf16.mxu0 0
    %142 = vmatpush1.bf16.msra.mxu0 0
    %143 = vmatprep.subr.bf16.mxu0 0
    %144 = vmatpush1.bf16.msra.mxu0 0
    %145 = vmatprep.subr.bf16.mxu0 0
    %146 = vmatpush1.bf16.msra.mxu0 0
    %147 = vmatprep.subr.bf16.mxu0 0
    %148 = vmatpush1.bf16.msra.mxu0 0
    %149 = vmatprep.subr.bf16.mxu0 0
    %150 = vmatpush1.bf16.msra.mxu0 0
    %151 = vmatprep.subr.bf16.mxu0 0
    %152 = vmatpush1.bf16.msra.mxu0 0
    %153 = vmatprep.subr.bf16.mxu0 0
    %154 = vmatpush1.bf16.msra.mxu0 0
    %155 = vmatprep.mubr.bf16.mxu0 0
    %156 = vmatmul.mubr.bf16.gmra.mrb[0].mxu0 %v73
    %v157 = vpop.f32.mrb[0].mxu0
    %v158 = vadd.f32 %v67, %v157
    %v159 = vpop.f32.mrb[0].mxu0
    %v160 = vpop.f32.mrb[0].mxu0
    %v161 = vadd.f32 %v67, %v160
    %v162 = vpop.f32.mrb[0].mxu0
    %163 = vdwg.mxu0
    %v164 = vmul.f32 %v158, 0.5
    %v165 = vmul.f32 %v161, 0.5
    %166 = vst [vmem:[#allocation7] sm:$0xff] %v164
    %167 = vst [vmem:[#allocation7 + $0x8] sm:$0xff] %v165
    // Predicated region
    $region22: #{tpu_custom_call.1} parent=1 // pred_check
      _
    $region23: #{tpu_custom_call.1} parent=1 // pred_check_branch
      %169 = sbr.rel (0) target = $region25
    $region24: #{tpu_custom_call.1} parent=1 // pred_region
      %s171 = ssub.s32 256, 256
      %172 = vsyncadd [#allocation4], %s171
      %s173 = sshll.u32 [#allocation7], 4
      %s174 = int_to_ptr.vmem [resolvable:$true] %s173
      %179 = dma.vmem_to_hbm [thread:$0]  %s174, 256, %s3, [#allocation4], 128, 128, 8
    $region25: #{tpu_custom_call.1} parent=1 // pred_fallthru
      _
    // Predicated region
    $region26: #{tpu_custom_call.1} parent=1 // pred_check
      _
    $region27: #{tpu_custom_call.1} parent=1 // pred_check_branch
      %181 = sbr.rel (0) target = $region29
    $region28: #{tpu_custom_call.1} parent=1 // pred_region
      %182 = dma.done [#allocation4], 256
    $region29: #{tpu_custom_call.1} parent=1 // pred_fallthru
      _
    %183 = vsyncpa [#allocation3], 1
    %184 = vsyncpa [#allocation6], 1
    %185 = vsyncpa [#allocation4], 1

</llo_original>
